<compile_context>
chip_gen: v6e
topology: v6e:2x2x1
jax: 0.10.0
libtpu: 0.0.40
codegen_flags: <defaults>
</compile_context>

<pallas_src>
import functools

import jax
import jax.numpy as jnp
from jax.experimental import pallas as pl
from jax.experimental.pallas import tpu as pltpu

INPUT_DIM = 6
H1_DIM = 50
H2_DIM = 50
LATENT_DIM = 2

LANES = 128                    # lane width of the packed parameter / output slabs
IN_LANES = 8                   # narrow input slab: x in 0:6, eps in 6:8
N_BLOCKS = 6                   # e1(+eps-selector), e2, fused head, d1(dup), d2, d_mean
BIAS_ROW0 = N_BLOCKS * LANES   # 768: bias block (one sublane row per layer)
MASK_ROW = BIAS_ROW0 + N_BLOCKS  # 774: mu-lane mask row
P_ROWS = BIAS_ROW0 + 8         # 776: pad bias block to a full (8,128) tile

# lanes of the packed output slab
XF_LO, XF_HI = 0, INPUT_DIM                          # x_fit   lanes 0:6
LV_LO, LV_HI = INPUT_DIM, INPUT_DIM + LATENT_DIM     # log_var lanes 6:8
MU_LO, MU_HI = LV_HI, LV_HI + LATENT_DIM             # mu      lanes 8:10


def _round_up(n, m):
    return ((n + m - 1) // m) * m


# --------------------------------------------------------------------------- #
# Kernel
# --------------------------------------------------------------------------- #
def vae_fused_kernel(in_ref, p_ref, out_ref):
    """in_ref : [TB, 8]    x in lanes 0:6, eps in lanes 6:8.
       p_ref  : [776, 128] packed parameter slab (see pack_params).
       out_ref: [TB, 128]  x_fit in 0:6, log_var in 6:8, mu in 8:10."""
    f32 = jnp.float32
    xin = in_ref[...].astype(f32)                      # [TB, 8]

    def w(i):   # [128, 128] weight block of layer i
        return p_ref[LANES * i:LANES * (i + 1), :]

    def b(i):   # [1, 128] bias row of layer i
        return p_ref[BIAS_ROW0 + i:BIAS_ROW0 + i + 1, :]

    w_e1 = p_ref[0:IN_LANES, :]                        # [8,128] e1 weights (eps rows zero)
    eps_sel = p_ref[IN_LANES:2 * IN_LANES, :]          # [8,128] eps -> lanes 6:8
    mu_mask = p_ref[MASK_ROW:MASK_ROW + 1, :]          # [1,128] 1.0 at mu lanes 8:10

    # --- encoder -----------------------------------------------------------
    # (PyTorch evaluates the e1/e2 stack twice for z_mean / z_log_var with
    #  identical results; evaluating it once is semantically identical.)
    h = jnp.maximum(jnp.dot(xin, w_e1, preferred_element_type=f32) + b(0), 0.0)
    h = jnp.maximum(jnp.dot(h, w(1), preferred_element_type=f32) + b(1), 0.0)
    # Fused e_log_var|e_mean head: log_var lands at lanes 6:8, mu at 8:10.
    head = jnp.dot(h, w(2), preferred_element_type=f32) + b(2)        # [TB,128]

    # --- reparameterize, lane-parallel (no narrow slices / no K=2 matmul) ---
    eps128 = jnp.dot(xin, eps_sel, preferred_element_type=f32)        # eps at 6:8
    # d_in lanes 6:8 = eps * exp(0.5*log_var), lanes 8:10 = mu, 0 elsewhere.
    d_in = head * mu_mask + eps128 * jnp.exp(0.5 * head)

    # --- decoder -------------------------------------------------------------
    # Layer-3 weight block holds W_d1 at BOTH rows 6:8 and 8:10, so this single
    # 128-wide matmul computes d1(mu + eps*std) == d1(z).
    d = jnp.maximum(jnp.dot(d_in, w(3), preferred_element_type=f32) + b(3), 0.0)
    d = jnp.maximum(jnp.dot(d, w(4), preferred_element_type=f32) + b(4), 0.0)
    x_fit = jnp.dot(d, w(5), preferred_element_type=f32) + b(5)       # lanes 0:6

    # x_fit occupies lanes 0:6, head occupies 6:10, both zero elsewhere -> one
    # add assembles the lane-dense packed output (single unmasked 128-lane store).
    out_ref[...] = x_fit + head


# --------------------------------------------------------------------------- #
# Host-side packing (call ONCE at init), wrapper
# --------------------------------------------------------------------------- #
_LAYER_ORDER = ["e1", "e2", "e_mean", "e_log_var", "d1", "d2", "d_mean"]


def pack_params(params):
    """Pack all weights/biases into one [776, 128] fp32 slab.

    rows   0:  8 : e1 weight (rows 0:6, cols 0:50); eps rows 6:8 stay zero.
    rows   8: 16 : eps-selector (identity from input lanes 6:8 to lanes 6:8).
    rows 128:256 : e2 weight.
    rows 256:384 : fused head: e_log_var -> cols 6:8, e_mean -> cols 8:10.
    rows 384:512 : d1 weight duplicated at rows 6:8 AND rows 8:10 (cols 0:50).
    rows 512:640 : d2 weight.        rows 640:768 : d_mean weight (cols 0:6).
    rows 768:774 : biases (one row per layer; head bias at cols 6:10).
    row  774     : mu-lane mask (1.0 at lanes 8:10).
    NOTE: the zero-padded regions are load-bearing (they kill garbage lanes).
    """
    (w_e1, b_e1) = params["e1"]
    (w_e2, b_e2) = params["e2"]
    (w_em, b_em) = params["e_mean"]
    (w_elv, b_elv) = params["e_log_var"]
    (w_d1, b_d1) = params["d1"]
    (w_d2, b_d2) = params["d2"]
    (w_dm, b_dm) = params["d_mean"]
    f32 = jnp.float32
    s = jnp.zeros((P_ROWS, LANES), f32)
    # block 0: e1 + eps selector
    s = s.at[0:INPUT_DIM, 0:H1_DIM].set(w_e1.astype(f32))
    s = s.at[IN_LANES + LV_LO, LV_LO].set(1.0)          # row 14 -> lane 6
    s = s.at[IN_LANES + LV_LO + 1, LV_LO + 1].set(1.0)  # row 15 -> lane 7
    # block 1: e2
    s = s.at[LANES:LANES + H1_DIM, 0:H2_DIM].set(w_e2.astype(f32))
    # block 2: fused head (log_var -> lanes 6:8, mean -> lanes 8:10)
    s = s.at[2 * LANES:2 * LANES + H2_DIM, LV_LO:LV_HI].set(w_elv.astype(f32))
    s = s.at[2 * LANES:2 * LANES + H2_DIM, MU_LO:MU_HI].set(w_em.astype(f32))
    # block 3: d1 duplicated (consumes eps*std from lanes 6:8 and mu from 8:10)
    s = s.at[3 * LANES + LV_LO:3 * LANES + LV_HI, 0:H2_DIM].set(w_d1.astype(f32))
    s = s.at[3 * LANES + MU_LO:3 * LANES + MU_HI, 0:H2_DIM].set(w_d1.astype(f32))
    # block 4: d2
    s = s.at[4 * LANES:4 * LANES + H2_DIM, 0:H1_DIM].set(w_d2.astype(f32))
    # block 5: d_mean
    s = s.at[5 * LANES:5 * LANES + H1_DIM, 0:INPUT_DIM].set(w_dm.astype(f32))
    # biases
    s = s.at[BIAS_ROW0 + 0, 0:H1_DIM].set(b_e1[0].astype(f32))
    s = s.at[BIAS_ROW0 + 1, 0:H2_DIM].set(b_e2[0].astype(f32))
    s = s.at[BIAS_ROW0 + 2, LV_LO:LV_HI].set(b_elv[0].astype(f32))
    s = s.at[BIAS_ROW0 + 2, MU_LO:MU_HI].set(b_em[0].astype(f32))
    s = s.at[BIAS_ROW0 + 3, 0:H2_DIM].set(b_d1[0].astype(f32))
    s = s.at[BIAS_ROW0 + 4, 0:H1_DIM].set(b_d2[0].astype(f32))
    s = s.at[BIAS_ROW0 + 5, 0:INPUT_DIM].set(b_dm[0].astype(f32))
    # mu-lane mask
    s = s.at[MASK_ROW, MU_LO:MU_HI].set(1.0)
    return s


def _pick_tile(batch, tb):
    tb = max(8, _round_up(tb, 8))
    b8 = _round_up(max(batch, 1), 8)
    if b8 <= tb:
        # Whole batch fits in one tile: split into two tiles when possible so the
        # "parallel" batch axis shards across both TensorCores on v7x.
        tb = _round_up((b8 + 1) // 2, 8) if b8 >= 16 else b8
    return tb


@functools.partial(jax.jit, static_argnames=("tb",))
def vae_forward(x, eps, param_slab, log_sigmas, *, tb=1024):
    """Full VAE forward in one Pallas call.

    x: [B, 6], eps: [B, 2] reparam noise, param_slab: pack_params(params).
    Returns (x_fit, mu, log_var, log_sigmas) mirroring VAE.forward; log_sigmas is
    a frozen parameter (requires_grad=False) with no compute -> host passthrough.
    """
    B = x.shape[0]
    tb = _pick_tile(B, tb)
    b_pad = _round_up(B, tb)

    # Narrow [B, 8] input slab: x in lanes 0:6, eps in lanes 6:8.
    xin = jnp.concatenate([x.astype(jnp.float32), eps.astype(jnp.float32)], axis=1)
    if b_pad != B:
        xin = jnp.pad(xin, ((0, b_pad - B), (0, 0)))

    # Raise scoped-VMEM limit only when a big batch tile needs it (v5e default is
    # 16 MiB; v6e/v7x 32 MiB).  Counts double-buffered in/out blocks + params.
    vmem_bytes = (2 * tb * IN_LANES * 4 + 2 * tb * LANES * 4
                  + 2 * P_ROWS * LANES * 4 + (2 << 20))
    cp_kwargs = dict(dimension_semantics=("parallel",))   # megacore on v7x
    if vmem_bytes > 14 * 1024 * 1024:
        cp_kwargs["vmem_limit_bytes"] = int(min(vmem_bytes, 60 * 1024 * 1024))

    out = pl.pallas_call(
        vae_fused_kernel,
        out_shape=jax.ShapeDtypeStruct((b_pad, LANES), jnp.float32),
        grid=(b_pad // tb,),
        in_specs=[
            pl.BlockSpec((tb, IN_LANES), lambda i: (i, 0)),    # narrow activations
            pl.BlockSpec((P_ROWS, LANES), lambda i: (0, 0)),   # params: VMEM-resident
        ],
        out_specs=pl.BlockSpec((tb, LANES), lambda i: (i, 0)),
        compiler_params=pltpu.CompilerParams(**cp_kwargs),
    )(xin, param_slab)

    x_fit = out[:B, XF_LO:XF_HI]
    log_var = out[:B, LV_LO:LV_HI]
    mu = out[:B, MU_LO:MU_HI]
    return x_fit, mu, log_var, log_sigmas


# --------------------------------------------------------------------------- #
# Reference (pure JAX) and init
# --------------------------------------------------------------------------- #
def _ref_linear(x, wb, relu=False):
    w, b = wb
    y = jnp.dot(x, w) + b
    return jnp.maximum(y, 0.0) if relu else y


def vae_forward_ref(x, eps, params):
    h = _ref_linear(x, params["e1"], relu=True)
    h = _ref_linear(h, params["e2"], relu=True)
    mu = _ref_linear(h, params["e_mean"])
    log_var = _ref_linear(h, params["e_log_var"])
    z = mu + eps * jnp.exp(0.5 * log_var)
    d = _ref_linear(z, params["d1"], relu=True)
    d = _ref_linear(d, params["d2"], relu=True)
    x_fit = _ref_linear(d, params["d_mean"])
    return x_fit, mu, log_var


def init_params(key):
    """Deterministic init matching nn.Linear's U(-1/sqrt(fan_in), 1/sqrt(fan_in)).
    Weights stored [in, out] (transpose of PyTorch), biases [1, out]."""
    dims = {
        "e1": (INPUT_DIM, H1_DIM),
        "e2": (H1_DIM, H2_DIM),
        "e_mean": (H2_DIM, LATENT_DIM),
        "e_log_var": (H2_DIM, LATENT_DIM),
        "d1": (LATENT_DIM, H2_DIM),
        "d2": (H2_DIM, H1_DIM),
        "d_mean": (H1_DIM, INPUT_DIM),
    }
    params = {}
    for name in _LAYER_ORDER:
        fan_in, fan_out = dims[name]
        key, kw, kb = jax.random.split(key, 3)
        bound = 1.0 / float(fan_in) ** 0.5
        w = jax.random.uniform(kw, (fan_in, fan_out), jnp.float32, -bound, bound)
        b = jax.random.uniform(kb, (1, fan_out), jnp.float32, -bound, bound)
        params[name] = (w, b)
    return params


if __name__ == "__main__":
    key = jax.random.PRNGKey(0)
    kx, keps, kp = jax.random.split(key, 3)

    B = 64   # small demo batch; still yields a >= 2-step grid for v7x megacore
    x = jax.random.normal(kx, (B, INPUT_DIM), dtype=jnp.float32)
    eps = jax.random.normal(keps, (B, LATENT_DIM), dtype=jnp.float32)  # reparam noise
    params = init_params(kp)
    # sigmas_init = sigma_true * ones(input_dim), sigma_true = 1 -> log_sigmas = 0
    log_sigmas = jnp.log(jnp.ones((INPUT_DIM,), dtype=jnp.float32))

    # Pack the parameter slab ONCE (hoisted out of the per-forward path).
    param_slab = pack_params(params)

    x_fit, mu, log_var, log_sigmas_out = vae_forward(x, eps, param_slab, log_sigmas)
    jax.block_until_ready((x_fit, mu, log_var, log_sigmas_out))

    assert x_fit.shape == (B, INPUT_DIM) and x_fit.dtype == jnp.float32
    assert mu.shape == (B, LATENT_DIM) and log_var.shape == (B, LATENT_DIM)
    assert log_sigmas_out.shape == (INPUT_DIM,)

    # Numerical check against the pure-JAX reference (both use the TPU's default
    # matmul precision; paths differ only in lane packing).
    x_fit_r, mu_r, log_var_r = vae_forward_ref(x, eps, params)
    assert bool(jnp.allclose(mu, mu_r, rtol=5e-2, atol=5e-2))
    assert bool(jnp.allclose(log_var, log_var_r, rtol=5e-2, atol=5e-2))
    assert bool(jnp.allclose(x_fit, x_fit_r, rtol=5e-2, atol=5e-2))

    print("KERNEL_OK")
</pallas_src>

<mosaic_0001>
module attributes {stable_mosaic.version = 11 : i64} {
  func.func @vae_fused_kernel(%arg0: i32, %arg1: memref<32x8xf32, #tpu.memory_space<vmem>>, %arg2: memref<776x128xf32, #tpu.memory_space<vmem>>, %arg3: memref<32x128xf32, #tpu.memory_space<vmem>>) attributes {dimension_semantics = [#tpu.dimension_semantics<parallel>], iteration_bounds = array<i64: 2>, scalar_prefetch = 0 : i64, scratch_operands = 0 : i64, tpu.core_type = #tpu.core_type<tc>, window_params = [{transform_indices = @transform_0, window_bounds = array<i64: 32, 8>}, {pipeline_mode = #tpu.pipeline_mode<synchronous>, transform_indices = @transform_1, window_bounds = array<i64: 776, 128>}, {transform_indices = @transform_2, window_bounds = array<i64: 32, 128>}]} {
    %c0 = arith.constant 0 : index
    %c0_0 = arith.constant 0 : index
    %0 = vector.load %arg1[%c0, %c0_0] : memref<32x8xf32, #tpu.memory_space<vmem>>, vector<32x8xf32>
    %c0_1 = arith.constant 0 : index
    %c0_2 = arith.constant 0 : index
    %1 = vector.load %arg2[%c0_1, %c0_2] : memref<776x128xf32, #tpu.memory_space<vmem>>, vector<8x128xf32>
    %c8 = arith.constant 8 : index
    %c0_3 = arith.constant 0 : index
    %2 = vector.load %arg2[%c8, %c0_3] : memref<776x128xf32, #tpu.memory_space<vmem>>, vector<8x128xf32>
    %c774 = arith.constant 774 : index
    %c0_4 = arith.constant 0 : index
    %3 = vector.load %arg2[%c774, %c0_4] : memref<776x128xf32, #tpu.memory_space<vmem>>, vector<1x128xf32>
    %cst = arith.constant dense<0.000000e+00> : vector<32x128xf32>
    %4 = tpu.matmul %0, %1, %cst {dimension_numbers = #tpu.dot_dimension_numbers<[1], [0], [0], [1], [0, 0, 1, 1], [], []>} : vector<32x8xf32>, vector<8x128xf32>, vector<32x128xf32> -> vector<32x128xf32>
    %c768 = arith.constant 768 : index
    %c0_5 = arith.constant 0 : index
    %5 = vector.load %arg2[%c768, %c0_5] : memref<776x128xf32, #tpu.memory_space<vmem>>, vector<1x128xf32>
    %6 = vector.broadcast %5 : vector<1x128xf32> to vector<32x128xf32>
    %7 = arith.addf %4, %6 : vector<32x128xf32>
    %cst_6 = arith.constant 0.000000e+00 : f32
    %8 = vector.broadcast %cst_6 : f32 to vector<32x128xf32>
    %9 = arith.maximumf %7, %8 : vector<32x128xf32>
    %c128 = arith.constant 128 : index
    %c0_7 = arith.constant 0 : index
    %10 = vector.load %arg2[%c128, %c0_7] : memref<776x128xf32, #tpu.memory_space<vmem>>, vector<128x128xf32>
    %cst_8 = arith.constant dense<0.000000e+00> : vector<32x128xf32>
    %11 = tpu.matmul %9, %10, %cst_8 {dimension_numbers = #tpu.dot_dimension_numbers<[1], [0], [0], [1], [0, 0, 1, 1], [], []>} : vector<32x128xf32>, vector<128x128xf32>, vector<32x128xf32> -> vector<32x128xf32>
    %c769 = arith.constant 769 : index
    %c0_9 = arith.constant 0 : index
    %12 = vector.load %arg2[%c769, %c0_9] : memref<776x128xf32, #tpu.memory_space<vmem>>, vector<1x128xf32>
    %13 = vector.broadcast %12 : vector<1x128xf32> to vector<32x128xf32>
    %14 = arith.addf %11, %13 : vector<32x128xf32>
    %cst_10 = arith.constant 0.000000e+00 : f32
    %15 = vector.broadcast %cst_10 : f32 to vector<32x128xf32>
    %16 = arith.maximumf %14, %15 : vector<32x128xf32>
    %c256 = arith.constant 256 : index
    %c0_11 = arith.constant 0 : index
    %17 = vector.load %arg2[%c256, %c0_11] : memref<776x128xf32, #tpu.memory_space<vmem>>, vector<128x128xf32>
    %cst_12 = arith.constant dense<0.000000e+00> : vector<32x128xf32>
    %18 = tpu.matmul %16, %17, %cst_12 {dimension_numbers = #tpu.dot_dimension_numbers<[1], [0], [0], [1], [0, 0, 1, 1], [], []>} : vector<32x128xf32>, vector<128x128xf32>, vector<32x128xf32> -> vector<32x128xf32>
    %c770 = arith.constant 770 : index
    %c0_13 = arith.constant 0 : index
    %19 = vector.load %arg2[%c770, %c0_13] : memref<776x128xf32, #tpu.memory_space<vmem>>, vector<1x128xf32>
    %20 = vector.broadcast %19 : vector<1x128xf32> to vector<32x128xf32>
    %21 = arith.addf %18, %20 : vector<32x128xf32>
    %cst_14 = arith.constant dense<0.000000e+00> : vector<32x128xf32>
    %22 = tpu.matmul %0, %2, %cst_14 {dimension_numbers = #tpu.dot_dimension_numbers<[1], [0], [0], [1], [0, 0, 1, 1], [], []>} : vector<32x8xf32>, vector<8x128xf32>, vector<32x128xf32> -> vector<32x128xf32>
    %23 = vector.broadcast %3 : vector<1x128xf32> to vector<32x128xf32>
    %24 = arith.mulf %21, %23 : vector<32x128xf32>
    %cst_15 = arith.constant 5.000000e-01 : f32
    %25 = vector.broadcast %cst_15 : f32 to vector<32x128xf32>
    %26 = arith.mulf %25, %21 : vector<32x128xf32>
    %27 = math.exp %26 : vector<32x128xf32>
    %28 = arith.mulf %22, %27 : vector<32x128xf32>
    %29 = arith.addf %24, %28 : vector<32x128xf32>
    %c384 = arith.constant 384 : index
    %c0_16 = arith.constant 0 : index
    %30 = vector.load %arg2[%c384, %c0_16] : memref<776x128xf32, #tpu.memory_space<vmem>>, vector<128x128xf32>
    %cst_17 = arith.constant dense<0.000000e+00> : vector<32x128xf32>
    %31 = tpu.matmul %29, %30, %cst_17 {dimension_numbers = #tpu.dot_dimension_numbers<[1], [0], [0], [1], [0, 0, 1, 1], [], []>} : vector<32x128xf32>, vector<128x128xf32>, vector<32x128xf32> -> vector<32x128xf32>
    %c771 = arith.constant 771 : index
    %c0_18 = arith.constant 0 : index
    %32 = vector.load %arg2[%c771, %c0_18] : memref<776x128xf32, #tpu.memory_space<vmem>>, vector<1x128xf32>
    %33 = vector.broadcast %32 : vector<1x128xf32> to vector<32x128xf32>
    %34 = arith.addf %31, %33 : vector<32x128xf32>
    %cst_19 = arith.constant 0.000000e+00 : f32
    %35 = vector.broadcast %cst_19 : f32 to vector<32x128xf32>
    %36 = arith.maximumf %34, %35 : vector<32x128xf32>
    %c512 = arith.constant 512 : index
    %c0_20 = arith.constant 0 : index
    %37 = vector.load %arg2[%c512, %c0_20] : memref<776x128xf32, #tpu.memory_space<vmem>>, vector<128x128xf32>
    %cst_21 = arith.constant dense<0.000000e+00> : vector<32x128xf32>
    %38 = tpu.matmul %36, %37, %cst_21 {dimension_numbers = #tpu.dot_dimension_numbers<[1], [0], [0], [1], [0, 0, 1, 1], [], []>} : vector<32x128xf32>, vector<128x128xf32>, vector<32x128xf32> -> vector<32x128xf32>
    %c772 = arith.constant 772 : index
    %c0_22 = arith.constant 0 : index
    %39 = vector.load %arg2[%c772, %c0_22] : memref<776x128xf32, #tpu.memory_space<vmem>>, vector<1x128xf32>
    %40 = vector.broadcast %39 : vector<1x128xf32> to vector<32x128xf32>
    %41 = arith.addf %38, %40 : vector<32x128xf32>
    %cst_23 = arith.constant 0.000000e+00 : f32
    %42 = vector.broadcast %cst_23 : f32 to vector<32x128xf32>
    %43 = arith.maximumf %41, %42 : vector<32x128xf32>
    %c640 = arith.constant 640 : index
    %c0_24 = arith.constant 0 : index
    %44 = vector.load %arg2[%c640, %c0_24] : memref<776x128xf32, #tpu.memory_space<vmem>>, vector<128x128xf32>
    %cst_25 = arith.constant dense<0.000000e+00> : vector<32x128xf32>
    %45 = tpu.matmul %43, %44, %cst_25 {dimension_numbers = #tpu.dot_dimension_numbers<[1], [0], [0], [1], [0, 0, 1, 1], [], []>} : vector<32x128xf32>, vector<128x128xf32>, vector<32x128xf32> -> vector<32x128xf32>
    %c773 = arith.constant 773 : index
    %c0_26 = arith.constant 0 : index
    %46 = vector.load %arg2[%c773, %c0_26] : memref<776x128xf32, #tpu.memory_space<vmem>>, vector<1x128xf32>
    %47 = vector.broadcast %46 : vector<1x128xf32> to vector<32x128xf32>
    %48 = arith.addf %45, %47 : vector<32x128xf32>
    %49 = arith.addf %48, %21 : vector<32x128xf32>
    %c0_27 = arith.constant 0 : index
    %c0_28 = arith.constant 0 : index
    %50 = vector.load %arg3[%c0_27, %c0_28] : memref<32x128xf32, #tpu.memory_space<vmem>>, vector<32x128xf32>
    tpu.vector_store %arg3[%c0_27, %c0_28], %49 {strides = array<i32>} : memref<32x128xf32, #tpu.memory_space<vmem>>, vector<32x128xf32>,
    return
  }
  func.func @transform_0(%arg0: i32) -> (i32, i32) {
    %c0_i32 = arith.constant 0 : i32
    %c0_i32_0 = arith.constant 0 : i32
    return %arg0, %c0_i32 : i32, i32
  }
  func.func @transform_1(%arg0: i32) -> (i32, i32) {
    %c0_i32 = arith.constant 0 : i32
    %c0_i32_0 = arith.constant 0 : i32
    %c0_i32_1 = arith.constant 0 : i32
    return %c0_i32, %c0_i32_0 : i32, i32
  }
  func.func @transform_2(%arg0: i32) -> (i32, i32) {
    %c0_i32 = arith.constant 0 : i32
    %c0_i32_0 = arith.constant 0 : i32
    return %arg0, %c0_i32 : i32, i32
  }
}

</mosaic_0001>

<llo_original>
// kernel: vae_forward.1
$region0: #{vae_forward.1}
  #allocation0 [shape = 'u32[]', space=smem, size = 0x4, offset = 0x4, fixed_abs, tag = 'smem constant byte address 0x4 - core index']
  #allocation1 [shape = 'u32[144,128]{1,0:T(1,128)}', space=vmem, size = 0x12000, scoped, tag = 'internal scratch']
  %s0 = inlined_call_operand.vmem [shape: f32[64,8], index: 0, kind: input, shape index: {}]
  %s1 = inlined_call_operand.hbm [shape: f32[776,128], index: 1, kind: input, shape index: {}]
  %s2 = inlined_call_operand.vmem [shape: f32[64,128], index: 2, kind: output, shape index: {}]
  %s3 = sld [smem:[#allocation0]]
  $region45: #{vae_forward.1} parent=0
    _
  %s5 = ssub.s32 1, %s3
  %s6 = scalar_select 0, %s5, %s3
  $region1: #{vae_forward.1} parent=0
    #allocation2 [shape = 'u8[397312]{0}', space=vmem, size = 0x61000, scoped, tag = 'input window, operand 1, single buffered']
    #allocation3 [shape = 's32[2]{0}', space=sflag, size = 0x8, scoped, tag = 'scoped memory for vae_forward.1']
    %7 = vsyncpa [#allocation3], 0
    loop: start=0, step=1, limit=4
    $region2: #{vae_forward.1} parent=1 // loop_pre_header
      _
    $region3: #{vae_forward.1} parent=1 // loop_header
      %s9 = sphi 0, %s13
      %p10 = scmp.ge.s32.totalorder %s9, 4
      %s19 = sphi 0, %s21
      %s22 = sphi 0, %s19
      %s23 = sphi 0, %s22
      %s39 = sphi 0, %s23
      %s43 = sphi 0, %s43
      %s45 = sphi 0, %s43
      %s46 = sphi 0, %s45
      %s60 = sphi 0, %s46
      %s66 = sphi 0, %s68
      %s69 = sphi 0, %s66
      %s70 = sphi 0, %s69
      %s86 = sphi 0, %s70
    $region4: #{vae_forward.1} parent=1 // loop_header_branch
      %12 = sbr.rel (%p10) target = $region8
    $region5: #{vae_forward.1} parent=1 // loop_body
      %s14 = ssub.s32 %s9, 1
      %s15 = ssub.s32 %s9, 2
      %s16 = sadd.s32 %s9, 1
      %s17 = ssub.s32 %s9, %s16
      %p18 = scmp.eq.s32.totalorder %s17, 0
      %s20 = sadd.s32 %s19, 1
      %s21 = scalar_select %p18, %s19, %s20
      %p24 = pneg %p18
      %p25 = scmp.eq.s32.totalorder %s9, 1
      %p26 = por %p24, %p25
      %p27 = scmp.ne.s32.totalorder %s19, %s22
      %p28 = scmp.eq.s32.totalorder %s9, 0
      %p29 = por %p27, %p28
      %p30 = scmp.ne.s32.totalorder %s19, %s22
      %p31 = scmp.eq.s32.totalorder %s14, 1
      %p32 = por %p30, %p31
      %p33 = scmp.ne.s32.totalorder %s22, %s23
      %p34 = scmp.eq.s32.totalorder %s14, 0
      %p35 = por %p33, %p34
      %p36 = scmp.ne.s32.totalorder %s22, %s23
      %p37 = scmp.eq.s32.totalorder %s15, 1
      %p38 = por %p36, %p37
      %p40 = scmp.ne.s32.totalorder %s23, %s39
      %p41 = scmp.eq.s32.totalorder %s15, 0
      %p42 = por %p40, %p41
      %s44 = sadd.s32 %s43, 1
      %p47 = scmp.eq.s32.totalorder %s9, 1
      %p48 = scmp.ne.s32.totalorder %s43, %s45
      %p49 = scmp.eq.s32.totalorder %s9, 0
      %p50 = por %p48, %p49
      %p51 = scmp.ne.s32.totalorder %s43, %s45
      %p52 = scmp.eq.s32.totalorder %s14, 1
      %p53 = por %p51, %p52
      %p54 = scmp.ne.s32.totalorder %s45, %s46
      %p55 = scmp.eq.s32.totalorder %s14, 0
      %p56 = por %p54, %p55
      %p57 = scmp.ne.s32.totalorder %s45, %s46
      %p58 = scmp.eq.s32.totalorder %s15, 1
      %p59 = por %p57, %p58
      %p61 = scmp.ne.s32.totalorder %s46, %s60
      %p62 = scmp.eq.s32.totalorder %s15, 0
      %p63 = por %p61, %p62
      %s64 = ssub.s32 %s9, %s16
      %p65 = scmp.eq.s32.totalorder %s64, 0
      %s67 = sadd.s32 %s66, 1
      %s68 = scalar_select %p65, %s66, %s67
      %p71 = pneg %p65
      %p72 = scmp.eq.s32.totalorder %s9, 1
      %p73 = por %p71, %p72
      %p74 = scmp.ne.s32.totalorder %s66, %s69
      %p75 = scmp.eq.s32.totalorder %s9, 0
      %p76 = por %p74, %p75
      %p77 = scmp.ne.s32.totalorder %s66, %s69
      %p78 = scmp.eq.s32.totalorder %s14, 1
      %p79 = por %p77, %p78
      %p80 = scmp.ne.s32.totalorder %s69, %s70
      %p81 = scmp.eq.s32.totalorder %s14, 0
      %p82 = por %p80, %p81
      %p83 = scmp.ne.s32.totalorder %s69, %s70
      %p84 = scmp.eq.s32.totalorder %s15, 1
      %p85 = por %p83, %p84
      %p87 = scmp.ne.s32.totalorder %s70, %s86
      %p88 = scmp.eq.s32.totalorder %s15, 0
      %p89 = por %p87, %p88
      %p90 = scmp.le.s32.totalorder 1, %s9
      %p91 = scmp.lt.s32.totalorder %s9, 3
      %p92 = pnand %p90, %p91
      %p93 = pneg %p92
      // Predicated region
      $region9: #{vae_forward.1} parent=5 // pred_check
        _
      $region10: #{vae_forward.1} parent=5 // pred_check_branch
        %95 = sbr.rel (%p92) target = $region12
      $region11: #{vae_forward.1} parent=5 // pred_region
        %s96 = ssub.s32 %s9, 1
        // Predicated region
        $region13: #{vae_forward.1} parent=11 // pred_check
          %p97 = pneg %p56
        $region14: #{vae_forward.1} parent=11 // pred_check_branch
          %99 = sbr.rel (%p97) target = $region16
        $region15: #{vae_forward.1} parent=11 // pred_region
          %s101 = ssub.s32 12416, 12416
          %102 = vsyncadd [#allocation3], %s101
          %s103 = sshll.u32 [#allocation2], 4
          %s104 = int_to_ptr.vmem [resolvable:$true] %s103
          %109 = dma.hbm_to_vmem [thread:$0]  %s1, 12416, %s104, [#allocation3], 128, 128, 8
        $region16: #{vae_forward.1} parent=11 // pred_fallthru
          _
      $region12: #{vae_forward.1} parent=5 // pred_fallthru
        _
      %p110 = scmp.lt.s32.totalorder %s9, 2
      // Predicated region
      $region17: #{vae_forward.1} parent=5 // pred_check
        %p111 = pneg %p110
      $region18: #{vae_forward.1} parent=5 // pred_check_branch
        %113 = sbr.rel (%p111) target = $region20
      $region19: #{vae_forward.1} parent=5 // pred_region
        // Predicated region
        $region21: #{vae_forward.1} parent=19 // pred_check
          %p114 = pneg %p29
        $region22: #{vae_forward.1} parent=19 // pred_check_branch
          %116 = sbr.rel (%p114) target = $region24
        $region23: #{vae_forward.1} parent=19 // pred_region
          %s117 = smul.u32 4, %s9
          %p118 = scmp.lt.s32.totalorder %s117, 7
          %s119 = scalar_select %p118, %s117, 7
          %s120 = smul.addr %s119, 8
          %s121 = scalar_lea.vmem %s0, %s120
          %s122 = smul.u32 4, %s9
        $region24: #{vae_forward.1} parent=19 // pred_fallthru
          _
      $region20: #{vae_forward.1} parent=5 // pred_fallthru
        _
      %p123 = scmp.le.s32.totalorder 1, %s9
      %p124 = scmp.lt.s32.totalorder %s9, 3
      %p125 = pnand %p123, %p124
      %p126 = pneg %p125
      // Predicated region
      $region25: #{vae_forward.1} parent=5 // pred_check
        _
      $region26: #{vae_forward.1} parent=5 // pred_check_branch
        %128 = sbr.rel (%p125) target = $region28
      $region27: #{vae_forward.1} parent=5 // pred_region
        %s129 = ssub.s32 %s9, 1
        // Predicated region
        $region29: #{vae_forward.1} parent=27 // pred_check
          %p130 = pneg %p56
        $region30: #{vae_forward.1} parent=27 // pred_check_branch
          %132 = sbr.rel (%p130) target = $region32
        $region31: #{vae_forward.1} parent=27 // pred_region
          %133 = dma.done [#allocation3], 12416
        $region32: #{vae_forward.1} parent=27 // pred_fallthru
          _
        %s134 = smul.u32 4, %s14
        %p135 = scmp.lt.s32.totalorder %s134, 7
        %s136 = scalar_select %p135, %s134, 7
        %s137 = smul.addr %s136, 8
        %s138 = scalar_lea.vmem %s0, %s137
        %p139 = pneg %p35
        %p140 = pneg %p32
        %p141 = pneg %p56
        %p142 = pneg %p53
        %p143 = pneg %p82
        %p144 = pneg %p79
        %s145 = smul.u32 4, %s14
        %p146 = scmp.lt.s32.totalorder %s145, 7
        %s147 = scalar_select %p146, %s145, 7
        %s148 = smul.addr %s147, 8
        %s149 = scalar_lea.vmem %s2, %s148
        %s150 = smul.u32 4, %s14
        %p151 = scmp.lt.s32.totalorder %s150, 7
        %s152 = scalar_select %p151, %s150, 7
        %s153 = smul.addr %s152, 8
        %s154 = scalar_lea.vmem %s0, %s153
        %s155 = smul.u32 4, %s14
        %s156 = smul.u32 4, %s14
        %p157 = scmp.lt.s32.totalorder %s156, 7
        %s158 = scalar_select %p157, %s156, 7
        %s159 = smul.addr %s158, 8
        %s160 = scalar_lea.vmem %s2, %s159
        %s161 = smul.u32 4, %s14
        %v162 = vld [vmem:[%s154] sm:$0xff]
        %v163 = vld [vmem:[%s154 + $0x8] sm:$0xff]
        %v164 = vld [vmem:[%s154 + $0x10] sm:$0xff]
        %v165 = vld [vmem:[%s154 + $0x18] sm:$0xff]
        %v166 = vld [vmem:[#allocation2] sm:$0xff]
        %v167 = vld [vmem:[#allocation2 + $0x8] sm:$0xff]
        %v168 = vld [vmem:[#allocation2 + $0x306] sm:$0x1]
        %v169 = vld [vmem:[#allocation2 + $0x300] sm:$0x1]
        %v170 = vlaneseq
        %v171 = vshrl.u32 %v170, 7
        %v172 = vsub.s32 0, %v171
        %v173 = vrot.slane %v169, %v172
        %vm174 = vcmask 64512
        %v176 = vsel %vm174, %v162, 0
        %v179 = vsel %vm174, %v163, 0
        %v182 = vsel %vm174, %v164, 0
        %v185 = vsel %vm174, %v165, 0
        %187 = vmatprep.subr.mxu0 0.0
        %188 = vmatpush1.msra.mxu0 0.0
        %189 = vmatprep.subr.mxu0 0.0
        %190 = vmatpush1.msra.mxu0 0.0
        %191 = vmatprep.subr.mxu0 0.0
        %192 = vmatpush1.msra.mxu0 0.0
        %193 = vmatprep.subr.mxu0 0.0
        %194 = vmatpush1.msra.mxu0 0.0
        %195 = vmatprep.subr.mxu0 0.0
        %196 = vmatpush1.msra.mxu0 0.0
        %197 = vmatprep.subr.mxu0 0.0
        %198 = vmatpush1.msra.mxu0 0.0
        %199 = vmatprep.subr.mxu0 0.0
        %200 = vmatpush1.msra.mxu0 0.0
        %201 = vmatprep.subr.mxu0 0.0
        %202 = vmatpush1.msra.mxu0 0.0
        %203 = vmatprep.subr.mxu0 0.0
        %204 = vmatpush1.msra.mxu0 0.0
        %205 = vmatprep.subr.mxu0 0.0
        %206 = vmatpush1.msra.mxu0 0.0
        %207 = vmatprep.subr.mxu0 0.0
        %208 = vmatpush1.msra.mxu0 0.0
        %209 = vmatprep.subr.mxu0 0.0
        %210 = vmatpush1.msra.mxu0 0.0
        %211 = vmatprep.subr.mxu0 0.0
        %212 = vmatpush1.msra.mxu0 0.0
        %213 = vmatprep.subr.mxu0 0.0
        %214 = vmatpush1.msra.mxu0 0.0
        %215 = vmatprep.subr.mxu0 0.0
        %216 = vmatpush1.msra.mxu0 0.0
        %217 = vmatprep.subr.mxu0 0.0
        %218 = vmatpush1.msra.mxu0 %v166
        %219 = vmatprep.subr.mxu0 0.0
        %220 = vmatpush2.msra.mxu0 0.0
        %221 = vmatprep.subr.mxu0 0.0
        %222 = vmatpush2.msra.mxu0 0.0
        %223 = vmatprep.subr.mxu0 0.0
        %224 = vmatpush2.msra.mxu0 0.0
        %225 = vmatprep.subr.mxu0 0.0
        %226 = vmatpush2.msra.mxu0 0.0
        %227 = vmatprep.subr.mxu0 0.0
        %228 = vmatpush2.msra.mxu0 0.0
        %229 = vmatprep.subr.mxu0 0.0
        %230 = vmatpush2.msra.mxu0 0.0
        %231 = vmatprep.subr.mxu0 0.0
        %232 = vmatpush2.msra.mxu0 0.0
        %233 = vmatprep.subr.mxu0 0.0
        %234 = vmatpush2.msra.mxu0 0.0
        %235 = vmatprep.subr.mxu0 0.0
        %236 = vmatpush2.msra.mxu0 0.0
        %237 = vmatprep.subr.mxu0 0.0
        %238 = vmatpush2.msra.mxu0 0.0
        %239 = vmatprep.subr.mxu0 0.0
        %240 = vmatpush2.msra.mxu0 0.0
        %241 = vmatprep.subr.mxu0 0.0
        %242 = vmatpush2.msra.mxu0 0.0
        %243 = vmatprep.subr.mxu0 0.0
        %244 = vmatpush2.msra.mxu0 0.0
        %245 = vmatprep.subr.mxu0 0.0
        %246 = vmatpush2.msra.mxu0 0.0
        %247 = vmatprep.subr.mxu0 0.0
        %248 = vmatpush2.msra.mxu0 0.0
        %249 = vmatprep.subr.mxu0 0.0
        %250 = vmatpush2.msra.mxu0 0.0
        %251 = vmatprep.mubr.f32.mxu0 0.0
        %252 = vmatmul.mubr.f32.gmra.mxu0 %v176
        %v253 = vpop.f32.mrf.mxu0
        %v254 = vadd.f32 %v173, %v253
        %v255 = vpop.f32.mrf.mxu0
        %256 = vmatprep.mubr.f32.mxu0 0.0
        %257 = vmatmul.mubr.f32.gmra.mxu0 %v179
        %v258 = vpop.f32.mrf.mxu0
        %v259 = vadd.f32 %v173, %v258
        %v260 = vpop.f32.mrf.mxu0
        %261 = vmatprep.mubr.f32.mxu0 0.0
        %262 = vmatmul.mubr.f32.gmra.mxu0 %v182
        %v263 = vpop.f32.mrf.mxu0
        %v264 = vadd.f32 %v173, %v263
        %v265 = vpop.f32.mrf.mxu0
        %266 = vmatprep.mubr.f32.mxu0 0.0
        %267 = vmatmul.mubr.f32.gmra.mxu0 %v185
        %v268 = vpop.f32.mrf.mxu0
        %v269 = vadd.f32 %v173, %v268
        %v270 = vpop.f32.mrf.mxu0
        %271 = vdwg.mxu0
        %v272 = vmax.f32 %v254, 0.0
        %v273 = vmax.f32 %v259, 0.0
        %v274 = vmax.f32 %v264, 0.0
        %v275 = vmax.f32 %v269, 0.0
        %v276 = vld [vmem:[#allocation2 + $0x80] sm:$0xff]
        %v277 = vld [vmem:[#allocation2 + $0x88] sm:$0xff]
        %v278 = vld [vmem:[#allocation2 + $0x90] sm:$0xff]
        %v279 = vld [vmem:[#allocation2 + $0x98] sm:$0xff]
        %v280 = vld [vmem:[#allocation2 + $0xa0] sm:$0xff]
        %v281 = vld [vmem:[#allocation2 + $0xa8] sm:$0xff]
        %v282 = vld [vmem:[#allocation2 + $0xb0] sm:$0xff]
        %v283 = vld [vmem:[#allocation2 + $0xb8] sm:$0xff]
        %v284 = vld [vmem:[#allocation2 + $0xc0] sm:$0xff]
        %v285 = vld [vmem:[#allocation2 + $0xc8] sm:$0xff]
        %v286 = vld [vmem:[#allocation2 + $0xd0] sm:$0xff]
        %v287 = vld [vmem:[#allocation2 + $0xd8] sm:$0xff]
        %v288 = vld [vmem:[#allocation2 + $0xe0] sm:$0xff]
        %v289 = vld [vmem:[#allocation2 + $0xe8] sm:$0xff]
        %v290 = vld [vmem:[#allocation2 + $0xf0] sm:$0xff]
        %v291 = vld [vmem:[#allocation2 + $0xf8] sm:$0xff]
        %v292 = vld [vmem:[#allocation2 + $0x301] sm:$0x1]
        %v293 = vlaneseq
        %v294 = vshrl.u32 %v293, 7
        %v295 = vsub.s32 0, %v294
        %v296 = vrot.slane %v292, %v295
        %297 = vmatprep.subr.mxu0 0.0
        %298 = vmatpush1.msra.mxu0 %v291
        %299 = vmatprep.subr.mxu0 0.0
        %300 = vmatpush1.msra.mxu0 %v290
        %301 = vmatprep.subr.mxu0 0.0
        %302 = vmatpush1.msra.mxu0 %v289
        %303 = vmatprep.subr.mxu0 0.0
        %304 = vmatpush1.msra.mxu0 %v288
        %305 = vmatprep.subr.mxu0 0.0
        %306 = vmatpush1.msra.mxu0 %v287
        %307 = vmatprep.subr.mxu0 0.0
        %308 = vmatpush1.msra.mxu0 %v286
        %309 = vmatprep.subr.mxu0 0.0
        %310 = vmatpush1.msra.mxu0 %v285
        %311 = vmatprep.subr.mxu0 0.0
        %312 = vmatpush1.msra.mxu0 %v284
        %313 = vmatprep.subr.mxu0 0.0
        %314 = vmatpush1.msra.mxu0 %v283
        %315 = vmatprep.subr.mxu0 0.0
        %316 = vmatpush1.msra.mxu0 %v282
        %317 = vmatprep.subr.mxu0 0.0
        %318 = vmatpush1.msra.mxu0 %v281
        %319 = vmatprep.subr.mxu0 0.0
        %320 = vmatpush1.msra.mxu0 %v280
        %321 = vmatprep.subr.mxu0 0.0
        %322 = vmatpush1.msra.mxu0 %v279
        %323 = vmatprep.subr.mxu0 0.0
        %324 = vmatpush1.msra.mxu0 %v278
        %325 = vmatprep.subr.mxu0 0.0
        %326 = vmatpush1.msra.mxu0 %v277
        %327 = vmatprep.subr.mxu0 0.0
        %328 = vmatpush1.msra.mxu0 %v276
        %329 = vmatprep.subr.mxu0 0.0
        %330 = vmatpush2.msra.mxu0 0.0
        %331 = vmatprep.subr.mxu0 0.0
        %332 = vmatpush2.msra.mxu0 0.0
        %333 = vmatprep.subr.mxu0 0.0
        %334 = vmatpush2.msra.mxu0 0.0
        %335 = vmatprep.subr.mxu0 0.0
        %336 = vmatpush2.msra.mxu0 0.0
        %337 = vmatprep.subr.mxu0 0.0
        %338 = vmatpush2.msra.mxu0 0.0
        %339 = vmatprep.subr.mxu0 0.0
        %340 = vmatpush2.msra.mxu0 0.0
        %341 = vmatprep.subr.mxu0 0.0
        %342 = vmatpush2.msra.mxu0 0.0
        %343 = vmatprep.subr.mxu0 0.0
        %344 = vmatpush2.msra.mxu0 0.0
        %345 = vmatprep.subr.mxu0 0.0
        %346 = vmatpush2.msra.mxu0 0.0
        %347 = vmatprep.subr.mxu0 0.0
        %348 = vmatpush2.msra.mxu0 0.0
        %349 = vmatprep.subr.mxu0 0.0
        %350 = vmatpush2.msra.mxu0 0.0
        %351 = vmatprep.subr.mxu0 0.0
        %352 = vmatpush2.msra.mxu0 0.0
        %353 = vmatprep.subr.mxu0 0.0
        %354 = vmatpush2.msra.mxu0 0.0
        %355 = vmatprep.subr.mxu0 0.0
        %356 = vmatpush2.msra.mxu0 0.0
        %357 = vmatprep.subr.mxu0 0.0
        %358 = vmatpush2.msra.mxu0 0.0
        %359 = vmatprep.subr.mxu0 0.0
        %360 = vmatpush2.msra.mxu0 0.0
        %361 = vmatprep.mubr.f32.mxu0 0.0
        %362 = vmatmul.mubr.f32.gmra.mxu0 %v272
        %v363 = vpop.f32.mrf.mxu0
        %v364 = vadd.f32 %v296, %v363
        %v365 = vpop.f32.mrf.mxu0
        %366 = vmatprep.mubr.f32.mxu0 0.0
        %367 = vmatmul.mubr.f32.gmra.mxu0 %v273
        %v368 = vpop.f32.mrf.mxu0
        %v369 = vadd.f32 %v296, %v368
        %v370 = vpop.f32.mrf.mxu0
        %371 = vmatprep.mubr.f32.mxu0 0.0
        %372 = vmatmul.mubr.f32.gmra.mxu0 %v274
        %v373 = vpop.f32.mrf.mxu0
        %v374 = vadd.f32 %v296, %v373
        %v375 = vpop.f32.mrf.mxu0
        %376 = vmatprep.mubr.f32.mxu0 0.0
        %377 = vmatmul.mubr.f32.gmra.mxu0 %v275
        %v378 = vpop.f32.mrf.mxu0
        %v379 = vadd.f32 %v296, %v378
        %v380 = vpop.f32.mrf.mxu0
        %381 = vdwg.mxu0
        %v382 = vmax.f32 %v364, 0.0
        %v383 = vmax.f32 %v369, 0.0
        %v384 = vmax.f32 %v374, 0.0
        %v385 = vmax.f32 %v379, 0.0
        %v386 = vld [vmem:[#allocation2 + $0x100] sm:$0xff]
        %v387 = vld [vmem:[#allocation2 + $0x108] sm:$0xff]
        %v388 = vld [vmem:[#allocation2 + $0x110] sm:$0xff]
        %v389 = vld [vmem:[#allocation2 + $0x118] sm:$0xff]
        %v390 = vld [vmem:[#allocation2 + $0x120] sm:$0xff]
        %v391 = vld [vmem:[#allocation2 + $0x128] sm:$0xff]
        %v392 = vld [vmem:[#allocation2 + $0x130] sm:$0xff]
        %v393 = vld [vmem:[#allocation2 + $0x138] sm:$0xff]
        %v394 = vld [vmem:[#allocation2 + $0x140] sm:$0xff]
        %v395 = vld [vmem:[#allocation2 + $0x148] sm:$0xff]
        %v396 = vld [vmem:[#allocation2 + $0x150] sm:$0xff]
        %v397 = vld [vmem:[#allocation2 + $0x158] sm:$0xff]
        %v398 = vld [vmem:[#allocation2 + $0x160] sm:$0xff]
        %v399 = vld [vmem:[#allocation2 + $0x168] sm:$0xff]
        %v400 = vld [vmem:[#allocation2 + $0x170] sm:$0xff]
        %v401 = vld [vmem:[#allocation2 + $0x178] sm:$0xff]
        %v402 = vld [vmem:[#allocation2 + $0x302] sm:$0x1]
        %v403 = vlaneseq
        %v404 = vshrl.u32 %v403, 7
        %v405 = vsub.s32 0, %v404
        %v406 = vrot.slane %v402, %v405
        %407 = vmatprep.subr.mxu0 0.0
        %408 = vmatpush1.msra.mxu0 %v401
        %409 = vmatprep.subr.mxu0 0.0
        %410 = vmatpush1.msra.mxu0 %v400
        %411 = vmatprep.subr.mxu0 0.0
        %412 = vmatpush1.msra.mxu0 %v399
        %413 = vmatprep.subr.mxu0 0.0
        %414 = vmatpush1.msra.mxu0 %v398
        %415 = vmatprep.subr.mxu0 0.0
        %416 = vmatpush1.msra.mxu0 %v397
        %417 = vmatprep.subr.mxu0 0.0
        %418 = vmatpush1.msra.mxu0 %v396
        %419 = vmatprep.subr.mxu0 0.0
        %420 = vmatpush1.msra.mxu0 %v395
        %421 = vmatprep.subr.mxu0 0.0
        %422 = vmatpush1.msra.mxu0 %v394
        %423 = vmatprep.subr.mxu0 0.0
        %424 = vmatpush1.msra.mxu0 %v393
        %425 = vmatprep.subr.mxu0 0.0
        %426 = vmatpush1.msra.mxu0 %v392
        %427 = vmatprep.subr.mxu0 0.0
        %428 = vmatpush1.msra.mxu0 %v391
        %429 = vmatprep.subr.mxu0 0.0
        %430 = vmatpush1.msra.mxu0 %v390
        %431 = vmatprep.subr.mxu0 0.0
        %432 = vmatpush1.msra.mxu0 %v389
        %433 = vmatprep.subr.mxu0 0.0
        %434 = vmatpush1.msra.mxu0 %v388
        %435 = vmatprep.subr.mxu0 0.0
        %436 = vmatpush1.msra.mxu0 %v387
        %437 = vmatprep.subr.mxu0 0.0
        %438 = vmatpush1.msra.mxu0 %v386
        %439 = vmatprep.subr.mxu0 0.0
        %440 = vmatpush2.msra.mxu0 0.0
        %441 = vmatprep.subr.mxu0 0.0
        %442 = vmatpush2.msra.mxu0 0.0
        %443 = vmatprep.subr.mxu0 0.0
        %444 = vmatpush2.msra.mxu0 0.0
        %445 = vmatprep.subr.mxu0 0.0
        %446 = vmatpush2.msra.mxu0 0.0
        %447 = vmatprep.subr.mxu0 0.0
        %448 = vmatpush2.msra.mxu0 0.0
        %449 = vmatprep.subr.mxu0 0.0
        %450 = vmatpush2.msra.mxu0 0.0
        %451 = vmatprep.subr.mxu0 0.0
        %452 = vmatpush2.msra.mxu0 0.0
        %453 = vmatprep.subr.mxu0 0.0
        %454 = vmatpush2.msra.mxu0 0.0
        %455 = vmatprep.subr.mxu0 0.0
        %456 = vmatpush2.msra.mxu0 0.0
        %457 = vmatprep.subr.mxu0 0.0
        %458 = vmatpush2.msra.mxu0 0.0
        %459 = vmatprep.subr.mxu0 0.0
        %460 = vmatpush2.msra.mxu0 0.0
        %461 = vmatprep.subr.mxu0 0.0
        %462 = vmatpush2.msra.mxu0 0.0
        %463 = vmatprep.subr.mxu0 0.0
        %464 = vmatpush2.msra.mxu0 0.0
        %465 = vmatprep.subr.mxu0 0.0
        %466 = vmatpush2.msra.mxu0 0.0
        %467 = vmatprep.subr.mxu0 0.0
        %468 = vmatpush2.msra.mxu0 0.0
        %469 = vmatprep.subr.mxu0 0.0
        %470 = vmatpush2.msra.mxu0 0.0
        %471 = vmatprep.mubr.f32.mxu0 0.0
        %472 = vmatmul.mubr.f32.gmra.mxu0 %v382
        %v473 = vpop.f32.mrf.mxu0
        %v474 = vadd.f32 %v406, %v473
        %v475 = vpop.f32.mrf.mxu0
        %476 = vmatprep.mubr.f32.mxu0 0.0
        %477 = vmatmul.mubr.f32.gmra.mxu0 %v383
        %v478 = vpop.f32.mrf.mxu0
        %v479 = vadd.f32 %v406, %v478
        %v480 = vpop.f32.mrf.mxu0
        %481 = vmatprep.mubr.f32.mxu0 0.0
        %482 = vmatmul.mubr.f32.gmra.mxu0 %v384
        %v483 = vpop.f32.mrf.mxu0
        %v484 = vadd.f32 %v406, %v483
        %v485 = vpop.f32.mrf.mxu0
        %486 = vmatprep.mubr.f32.mxu0 0.0
        %487 = vmatmul.mubr.f32.gmra.mxu0 %v385
        %v488 = vpop.f32.mrf.mxu0
        %v489 = vadd.f32 %v406, %v488
        %v490 = vpop.f32.mrf.mxu0
        %491 = vdwg.mxu0
        %492 = vmatprep.subr.mxu0 0.0
        %493 = vmatpush1.msra.mxu0 0.0
        %494 = vmatprep.subr.mxu0 0.0
        %495 = vmatpush1.msra.mxu0 0.0
        %496 = vmatprep.subr.mxu0 0.0
        %497 = vmatpush1.msra.mxu0 0.0
        %498 = vmatprep.subr.mxu0 0.0
        %499 = vmatpush1.msra.mxu0 0.0
        %500 = vmatprep.subr.mxu0 0.0
        %501 = vmatpush1.msra.mxu0 0.0
        %502 = vmatprep.subr.mxu0 0.0
        %503 = vmatpush1.msra.mxu0 0.0
        %504 = vmatprep.subr.mxu0 0.0
        %505 = vmatpush1.msra.mxu0 0.0
        %506 = vmatprep.subr.mxu0 0.0
        %507 = vmatpush1.msra.mxu0 0.0
        %508 = vmatprep.subr.mxu0 0.0
        %509 = vmatpush1.msra.mxu0 0.0
        %510 = vmatprep.subr.mxu0 0.0
        %511 = vmatpush1.msra.mxu0 0.0
        %512 = vmatprep.subr.mxu0 0.0
        %513 = vmatpush1.msra.mxu0 0.0
        %514 = vmatprep.subr.mxu0 0.0
        %515 = vmatpush1.msra.mxu0 0.0
        %516 = vmatprep.subr.mxu0 0.0
        %517 = vmatpush1.msra.mxu0 0.0
        %518 = vmatprep.subr.mxu0 0.0
        %519 = vmatpush1.msra.mxu0 0.0
        %520 = vmatprep.subr.mxu0 0.0
        %521 = vmatpush1.msra.mxu0 0.0
        %522 = vmatprep.subr.mxu0 0.0
        %523 = vmatpush1.msra.mxu0 %v167
        %524 = vmatprep.subr.mxu0 0.0
        %525 = vmatpush2.msra.mxu0 0.0
        %526 = vmatprep.subr.mxu0 0.0
        %527 = vmatpush2.msra.mxu0 0.0
        %528 = vmatprep.subr.mxu0 0.0
        %529 = vmatpush2.msra.mxu0 0.0
        %530 = vmatprep.subr.mxu0 0.0
        %531 = vmatpush2.msra.mxu0 0.0
        %532 = vmatprep.subr.mxu0 0.0
        %533 = vmatpush2.msra.mxu0 0.0
        %534 = vmatprep.subr.mxu0 0.0
        %535 = vmatpush2.msra.mxu0 0.0
        %536 = vmatprep.subr.mxu0 0.0
        %537 = vmatpush2.msra.mxu0 0.0
        %538 = vmatprep.subr.mxu0 0.0
        %539 = vmatpush2.msra.mxu0 0.0
        %540 = vmatprep.subr.mxu0 0.0
        %541 = vmatpush2.msra.mxu0 0.0
        %542 = vmatprep.subr.mxu0 0.0
        %543 = vmatpush2.msra.mxu0 0.0
        %544 = vmatprep.subr.mxu0 0.0
        %545 = vmatpush2.msra.mxu0 0.0
        %546 = vmatprep.subr.mxu0 0.0
        %547 = vmatpush2.msra.mxu0 0.0
        %548 = vmatprep.subr.mxu0 0.0
        %549 = vmatpush2.msra.mxu0 0.0
        %550 = vmatprep.subr.mxu0 0.0
        %551 = vmatpush2.msra.mxu0 0.0
        %552 = vmatprep.subr.mxu0 0.0
        %553 = vmatpush2.msra.mxu0 0.0
        %554 = vmatprep.subr.mxu0 0.0
        %555 = vmatpush2.msra.mxu0 0.0
        %556 = vmatprep.mubr.f32.mxu0 0.0
        %557 = vmatmul.mubr.f32.gmra.mxu0 %v176
        %v558 = vpop.f32.mrf.mxu0
        %v559 = vadd.f32 0.0, %v558
        %v560 = vpop.f32.mrf.mxu0
        %561 = vmatprep.mubr.f32.mxu0 0.0
        %562 = vmatmul.mubr.f32.gmra.mxu0 %v179
        %v563 = vpop.f32.mrf.mxu0
        %v564 = vadd.f32 0.0, %v563
        %v565 = vpop.f32.mrf.mxu0
        %566 = vmatprep.mubr.f32.mxu0 0.0
        %567 = vmatmul.mubr.f32.gmra.mxu0 %v182
        %v568 = vpop.f32.mrf.mxu0
        %v569 = vadd.f32 0.0, %v568
        %v570 = vpop.f32.mrf.mxu0
        %571 = vmatprep.mubr.f32.mxu0 0.0
        %572 = vmatmul.mubr.f32.gmra.mxu0 %v185
        %v573 = vpop.f32.mrf.mxu0
        %v574 = vadd.f32 0.0, %v573
        %v575 = vpop.f32.mrf.mxu0
        %576 = vdwg.mxu0
        %v577 = vlaneseq
        %v578 = vshrl.u32 %v577, 7
        %v579 = vsub.s32 0, %v578
        %v580 = vrot.slane %v168, %v579
        %v581 = vmul.f32 %v474, %v580
        %v582 = vmul.f32 %v479, %v580
        %v583 = vmul.f32 %v484, %v580
        %v584 = vmul.f32 %v489, %v580
        %v585 = vmul.f32 %v474, 0.5
        %v586 = vmul.f32 %v479, 0.5
        %v587 = vmul.f32 %v484, 0.5
        %v588 = vmul.f32 %v489, 0.5
        %v589 = vmul.f32 %v585, 1.442695
        %v590 = vpow.pop %v589
        %v591 = vmul.f32 %v586, 1.442695
        %v592 = vpow.pop %v591
        %v593 = vmul.f32 %v587, 1.442695
        %v594 = vpow.pop %v593
        %v595 = vmul.f32 %v588, 1.442695
        %v596 = vpow.pop %v595
        %v597 = vmul.f32 %v559, %v590
        %v598 = vmul.f32 %v564, %v592
        %v599 = vmul.f32 %v569, %v594
        %v600 = vmul.f32 %v574, %v596
        %v601 = vadd.f32 %v581, %v597
        %v602 = vadd.f32 %v582, %v598
        %v603 = vadd.f32 %v583, %v599
        %v604 = vadd.f32 %v584, %v600
        %v605 = vld [vmem:[#allocation2 + $0x180] sm:$0xff]
        %v606 = vld [vmem:[#allocation2 + $0x188] sm:$0xff]
        %v607 = vld [vmem:[#allocation2 + $0x190] sm:$0xff]
        %v608 = vld [vmem:[#allocation2 + $0x198] sm:$0xff]
        %v609 = vld [vmem:[#allocation2 + $0x1a0] sm:$0xff]
        %v610 = vld [vmem:[#allocation2 + $0x1a8] sm:$0xff]
        %v611 = vld [vmem:[#allocation2 + $0x1b0] sm:$0xff]
        %v612 = vld [vmem:[#allocation2 + $0x1b8] sm:$0xff]
        %v613 = vld [vmem:[#allocation2 + $0x1c0] sm:$0xff]
        %v614 = vld [vmem:[#allocation2 + $0x1c8] sm:$0xff]
        %v615 = vld [vmem:[#allocation2 + $0x1d0] sm:$0xff]
        %v616 = vld [vmem:[#allocation2 + $0x1d8] sm:$0xff]
        %v617 = vld [vmem:[#allocation2 + $0x1e0] sm:$0xff]
        %v618 = vld [vmem:[#allocation2 + $0x1e8] sm:$0xff]
        %v619 = vld [vmem:[#allocation2 + $0x1f0] sm:$0xff]
        %v620 = vld [vmem:[#allocation2 + $0x1f8] sm:$0xff]
        %v621 = vld [vmem:[#allocation2 + $0x303] sm:$0x1]
        %v622 = vlaneseq
        %v623 = vshrl.u32 %v622, 7
        %v624 = vsub.s32 0, %v623
        %v625 = vrot.slane %v621, %v624
        %626 = vmatprep.subr.mxu0 0.0
        %627 = vmatpush1.msra.mxu0 %v620
        %628 = vmatprep.subr.mxu0 0.0
        %629 = vmatpush1.msra.mxu0 %v619
        %630 = vmatprep.subr.mxu0 0.0
        %631 = vmatpush1.msra.mxu0 %v618
        %632 = vmatprep.subr.mxu0 0.0
        %633 = vmatpush1.msra.mxu0 %v617
        %634 = vmatprep.subr.mxu0 0.0
        %635 = vmatpush1.msra.mxu0 %v616
        %636 = vmatprep.subr.mxu0 0.0
        %637 = vmatpush1.msra.mxu0 %v615
        %638 = vmatprep.subr.mxu0 0.0
        %639 = vmatpush1.msra.mxu0 %v614
        %640 = vmatprep.subr.mxu0 0.0
        %641 = vmatpush1.msra.mxu0 %v613
        %642 = vmatprep.subr.mxu0 0.0
        %643 = vmatpush1.msra.mxu0 %v612
        %644 = vmatprep.subr.mxu0 0.0
        %645 = vmatpush1.msra.mxu0 %v611
        %646 = vmatprep.subr.mxu0 0.0
        %647 = vmatpush1.msra.mxu0 %v610
        %648 = vmatprep.subr.mxu0 0.0
        %649 = vmatpush1.msra.mxu0 %v609
        %650 = vmatprep.subr.mxu0 0.0
        %651 = vmatpush1.msra.mxu0 %v608
        %652 = vmatprep.subr.mxu0 0.0
        %653 = vmatpush1.msra.mxu0 %v607
        %654 = vmatprep.subr.mxu0 0.0
        %655 = vmatpush1.msra.mxu0 %v606
        %656 = vmatprep.subr.mxu0 0.0
        %657 = vmatpush1.msra.mxu0 %v605
        %658 = vmatprep.subr.mxu0 0.0
        %659 = vmatpush2.msra.mxu0 0.0
        %660 = vmatprep.subr.mxu0 0.0
        %661 = vmatpush2.msra.mxu0 0.0
        %662 = vmatprep.subr.mxu0 0.0
        %663 = vmatpush2.msra.mxu0 0.0
        %664 = vmatprep.subr.mxu0 0.0
        %665 = vmatpush2.msra.mxu0 0.0
        %666 = vmatprep.subr.mxu0 0.0
        %667 = vmatpush2.msra.mxu0 0.0
        %668 = vmatprep.subr.mxu0 0.0
        %669 = vmatpush2.msra.mxu0 0.0
        %670 = vmatprep.subr.mxu0 0.0
        %671 = vmatpush2.msra.mxu0 0.0
        %672 = vmatprep.subr.mxu0 0.0
        %673 = vmatpush2.msra.mxu0 0.0
        %674 = vmatprep.subr.mxu0 0.0
        %675 = vmatpush2.msra.mxu0 0.0
        %676 = vmatprep.subr.mxu0 0.0
        %677 = vmatpush2.msra.mxu0 0.0
        %678 = vmatprep.subr.mxu0 0.0
        %679 = vmatpush2.msra.mxu0 0.0
        %680 = vmatprep.subr.mxu0 0.0
        %681 = vmatpush2.msra.mxu0 0.0
        %682 = vmatprep.subr.mxu0 0.0
        %683 = vmatpush2.msra.mxu0 0.0
        %684 = vmatprep.subr.mxu0 0.0
        %685 = vmatpush2.msra.mxu0 0.0
        %686 = vmatprep.subr.mxu0 0.0
        %687 = vmatpush2.msra.mxu0 0.0
        %688 = vmatprep.subr.mxu0 0.0
        %689 = vmatpush2.msra.mxu0 0.0
        %690 = vmatprep.mubr.f32.mxu0 0.0
        %691 = vmatmul.mubr.f32.gmra.mxu0 %v601
        %v692 = vpop.f32.mrf.mxu0
        %v693 = vadd.f32 %v625, %v692
        %v694 = vpop.f32.mrf.mxu0
        %695 = vmatprep.mubr.f32.mxu0 0.0
        %696 = vmatmul.mubr.f32.gmra.mxu0 %v602
        %v697 = vpop.f32.mrf.mxu0
        %v698 = vadd.f32 %v625, %v697
        %v699 = vpop.f32.mrf.mxu0
        %700 = vmatprep.mubr.f32.mxu0 0.0
        %701 = vmatmul.mubr.f32.gmra.mxu0 %v603
        %v702 = vpop.f32.mrf.mxu0
        %v703 = vadd.f32 %v625, %v702
        %v704 = vpop.f32.mrf.mxu0
        %705 = vmatprep.mubr.f32.mxu0 0.0
        %706 = vmatmul.mubr.f32.gmra.mxu0 %v604
        %v707 = vpop.f32.mrf.mxu0
        %v708 = vadd.f32 %v625, %v707
        %v709 = vpop.f32.mrf.mxu0
        %710 = vdwg.mxu0
        %v711 = vmax.f32 %v693, 0.0
        %v712 = vmax.f32 %v698, 0.0
        %v713 = vmax.f32 %v703, 0.0
        %v714 = vmax.f32 %v708, 0.0
        %v715 = vld [vmem:[#allocation2 + $0x200] sm:$0xff]
        %v716 = vld [vmem:[#allocation2 + $0x208] sm:$0xff]
        %v717 = vld [vmem:[#allocation2 + $0x210] sm:$0xff]
        %v718 = vld [vmem:[#allocation2 + $0x218] sm:$0xff]
        %v719 = vld [vmem:[#allocation2 + $0x220] sm:$0xff]
        %v720 = vld [vmem:[#allocation2 + $0x228] sm:$0xff]
        %v721 = vld [vmem:[#allocation2 + $0x230] sm:$0xff]
        %v722 = vld [vmem:[#allocation2 + $0x238] sm:$0xff]
        %v723 = vld [vmem:[#allocation2 + $0x240] sm:$0xff]
        %v724 = vld [vmem:[#allocation2 + $0x248] sm:$0xff]
        %v725 = vld [vmem:[#allocation2 + $0x250] sm:$0xff]
        %v726 = vld [vmem:[#allocation2 + $0x258] sm:$0xff]
        %v727 = vld [vmem:[#allocation2 + $0x260] sm:$0xff]
        %v728 = vld [vmem:[#allocation2 + $0x268] sm:$0xff]
        %v729 = vld [vmem:[#allocation2 + $0x270] sm:$0xff]
        %v730 = vld [vmem:[#allocation2 + $0x278] sm:$0xff]
        %v731 = vld [vmem:[#allocation2 + $0x304] sm:$0x1]
        %v732 = vlaneseq
        %v733 = vshrl.u32 %v732, 7
        %v734 = vsub.s32 0, %v733
        %v735 = vrot.slane %v731, %v734
        %736 = vmatprep.subr.mxu0 0.0
        %737 = vmatpush1.msra.mxu0 %v730
        %738 = vmatprep.subr.mxu0 0.0
        %739 = vmatpush1.msra.mxu0 %v729
        %740 = vmatprep.subr.mxu0 0.0
        %741 = vmatpush1.msra.mxu0 %v728
        %742 = vmatprep.subr.mxu0 0.0
        %743 = vmatpush1.msra.mxu0 %v727
        %744 = vmatprep.subr.mxu0 0.0
        %745 = vmatpush1.msra.mxu0 %v726
        %746 = vmatprep.subr.mxu0 0.0
        %747 = vmatpush1.msra.mxu0 %v725
        %748 = vmatprep.subr.mxu0 0.0
        %749 = vmatpush1.msra.mxu0 %v724
        %750 = vmatprep.subr.mxu0 0.0
        %751 = vmatpush1.msra.mxu0 %v723
        %752 = vmatprep.subr.mxu0 0.0
        %753 = vmatpush1.msra.mxu0 %v722
        %754 = vmatprep.subr.mxu0 0.0
        %755 = vmatpush1.msra.mxu0 %v721
        %756 = vmatprep.subr.mxu0 0.0
        %757 = vmatpush1.msra.mxu0 %v720
        %758 = vmatprep.subr.mxu0 0.0
        %759 = vmatpush1.msra.mxu0 %v719
        %760 = vmatprep.subr.mxu0 0.0
        %761 = vmatpush1.msra.mxu0 %v718
        %762 = vmatprep.subr.mxu0 0.0
        %763 = vmatpush1.msra.mxu0 %v717
        %764 = vmatprep.subr.mxu0 0.0
        %765 = vmatpush1.msra.mxu0 %v716
        %766 = vmatprep.subr.mxu0 0.0
        %767 = vmatpush1.msra.mxu0 %v715
        %768 = vmatprep.subr.mxu0 0.0
        %769 = vmatpush2.msra.mxu0 0.0
        %770 = vmatprep.subr.mxu0 0.0
        %771 = vmatpush2.msra.mxu0 0.0
        %772 = vmatprep.subr.mxu0 0.0
        %773 = vmatpush2.msra.mxu0 0.0
        %774 = vmatprep.subr.mxu0 0.0
        %775 = vmatpush2.msra.mxu0 0.0
        %776 = vmatprep.subr.mxu0 0.0
        %777 = vmatpush2.msra.mxu0 0.0
        %778 = vmatprep.subr.mxu0 0.0
        %779 = vmatpush2.msra.mxu0 0.0
        %780 = vmatprep.subr.mxu0 0.0
        %781 = vmatpush2.msra.mxu0 0.0
        %782 = vmatprep.subr.mxu0 0.0
        %783 = vmatpush2.msra.mxu0 0.0
        %784 = vmatprep.subr.mxu0 0.0
        %785 = vmatpush2.msra.mxu0 0.0
        %786 = vmatprep.subr.mxu0 0.0
        %787 = vmatpush2.msra.mxu0 0.0
        %788 = vmatprep.subr.mxu0 0.0
        %789 = vmatpush2.msra.mxu0 0.0
        %790 = vmatprep.subr.mxu0 0.0
        %791 = vmatpush2.msra.mxu0 0.0
        %792 = vmatprep.subr.mxu0 0.0
        %793 = vmatpush2.msra.mxu0 0.0
        %794 = vmatprep.subr.mxu0 0.0
        %795 = vmatpush2.msra.mxu0 0.0
        %796 = vmatprep.subr.mxu0 0.0
        %797 = vmatpush2.msra.mxu0 0.0
        %798 = vmatprep.subr.mxu0 0.0
        %799 = vmatpush2.msra.mxu0 0.0
        %800 = vmatprep.mubr.f32.mxu0 0.0
        %801 = vmatmul.mubr.f32.gmra.mxu0 %v711
        %v802 = vpop.f32.mrf.mxu0
        %v803 = vadd.f32 %v735, %v802
        %v804 = vpop.f32.mrf.mxu0
        %805 = vmatprep.mubr.f32.mxu0 0.0
        %806 = vmatmul.mubr.f32.gmra.mxu0 %v712
        %v807 = vpop.f32.mrf.mxu0
        %v808 = vadd.f32 %v735, %v807
        %v809 = vpop.f32.mrf.mxu0
        %810 = vmatprep.mubr.f32.mxu0 0.0
        %811 = vmatmul.mubr.f32.gmra.mxu0 %v713
        %v812 = vpop.f32.mrf.mxu0
        %v813 = vadd.f32 %v735, %v812
        %v814 = vpop.f32.mrf.mxu0
        %815 = vmatprep.mubr.f32.mxu0 0.0
        %816 = vmatmul.mubr.f32.gmra.mxu0 %v714
        %v817 = vpop.f32.mrf.mxu0
        %v818 = vadd.f32 %v735, %v817
        %v819 = vpop.f32.mrf.mxu0
        %820 = vdwg.mxu0
        %v821 = vmax.f32 %v803, 0.0
        %v822 = vmax.f32 %v808, 0.0
        %v823 = vmax.f32 %v813, 0.0
        %v824 = vmax.f32 %v818, 0.0
        %v825 = vld [vmem:[#allocation2 + $0x280] sm:$0xff]
        %v826 = vld [vmem:[#allocation2 + $0x288] sm:$0xff]
        %v827 = vld [vmem:[#allocation2 + $0x290] sm:$0xff]
        %v828 = vld [vmem:[#allocation2 + $0x298] sm:$0xff]
        %v829 = vld [vmem:[#allocation2 + $0x2a0] sm:$0xff]
        %v830 = vld [vmem:[#allocation2 + $0x2a8] sm:$0xff]
        %v831 = vld [vmem:[#allocation2 + $0x2b0] sm:$0xff]
        %v832 = vld [vmem:[#allocation2 + $0x2b8] sm:$0xff]
        %v833 = vld [vmem:[#allocation2 + $0x2c0] sm:$0xff]
        %v834 = vld [vmem:[#allocation2 + $0x2c8] sm:$0xff]
        %v835 = vld [vmem:[#allocation2 + $0x2d0] sm:$0xff]
        %v836 = vld [vmem:[#allocation2 + $0x2d8] sm:$0xff]
        %v837 = vld [vmem:[#allocation2 + $0x2e0] sm:$0xff]
        %v838 = vld [vmem:[#allocation2 + $0x2e8] sm:$0xff]
        %v839 = vld [vmem:[#allocation2 + $0x2f0] sm:$0xff]
        %v840 = vld [vmem:[#allocation2 + $0x2f8] sm:$0xff]
        %v841 = vld [vmem:[#allocation2 + $0x305] sm:$0x1]
        %v842 = vlaneseq
        %v843 = vshrl.u32 %v842, 7
        %v844 = vsub.s32 0, %v843
        %v845 = vrot.slane %v841, %v844
        %846 = vmatprep.subr.mxu0 0.0
        %847 = vmatpush1.msra.mxu0 %v840
        %848 = vmatprep.subr.mxu0 0.0
        %849 = vmatpush1.msra.mxu0 %v839
        %850 = vmatprep.subr.mxu0 0.0
        %851 = vmatpush1.msra.mxu0 %v838
        %852 = vmatprep.subr.mxu0 0.0
        %853 = vmatpush1.msra.mxu0 %v837
        %854 = vmatprep.subr.mxu0 0.0
        %855 = vmatpush1.msra.mxu0 %v836
        %856 = vmatprep.subr.mxu0 0.0
        %857 = vmatpush1.msra.mxu0 %v835
        %858 = vmatprep.subr.mxu0 0.0
        %859 = vmatpush1.msra.mxu0 %v834
        %860 = vmatprep.subr.mxu0 0.0
        %861 = vmatpush1.msra.mxu0 %v833
        %862 = vmatprep.subr.mxu0 0.0
        %863 = vmatpush1.msra.mxu0 %v832
        %864 = vmatprep.subr.mxu0 0.0
        %865 = vmatpush1.msra.mxu0 %v831
        %866 = vmatprep.subr.mxu0 0.0
        %867 = vmatpush1.msra.mxu0 %v830
        %868 = vmatprep.subr.mxu0 0.0
        %869 = vmatpush1.msra.mxu0 %v829
        %870 = vmatprep.subr.mxu0 0.0
        %871 = vmatpush1.msra.mxu0 %v828
        %872 = vmatprep.subr.mxu0 0.0
        %873 = vmatpush1.msra.mxu0 %v827
        %874 = vmatprep.subr.mxu0 0.0
        %875 = vmatpush1.msra.mxu0 %v826
        %876 = vmatprep.subr.mxu0 0.0
        %877 = vmatpush1.msra.mxu0 %v825
        %878 = vmatprep.subr.mxu0 0.0
        %879 = vmatpush2.msra.mxu0 0.0
        %880 = vmatprep.subr.mxu0 0.0
        %881 = vmatpush2.msra.mxu0 0.0
        %882 = vmatprep.subr.mxu0 0.0
        %883 = vmatpush2.msra.mxu0 0.0
        %884 = vmatprep.subr.mxu0 0.0
        %885 = vmatpush2.msra.mxu0 0.0
        %886 = vmatprep.subr.mxu0 0.0
        %887 = vmatpush2.msra.mxu0 0.0
        %888 = vmatprep.subr.mxu0 0.0
        %889 = vmatpush2.msra.mxu0 0.0
        %890 = vmatprep.subr.mxu0 0.0
        %891 = vmatpush2.msra.mxu0 0.0
        %892 = vmatprep.subr.mxu0 0.0
        %893 = vmatpush2.msra.mxu0 0.0
        %894 = vmatprep.subr.mxu0 0.0
        %895 = vmatpush2.msra.mxu0 0.0
        %896 = vmatprep.subr.mxu0 0.0
        %897 = vmatpush2.msra.mxu0 0.0
        %898 = vmatprep.subr.mxu0 0.0
        %899 = vmatpush2.msra.mxu0 0.0
        %900 = vmatprep.subr.mxu0 0.0
        %901 = vmatpush2.msra.mxu0 0.0
        %902 = vmatprep.subr.mxu0 0.0
        %903 = vmatpush2.msra.mxu0 0.0
        %904 = vmatprep.subr.mxu0 0.0
        %905 = vmatpush2.msra.mxu0 0.0
        %906 = vmatprep.subr.mxu0 0.0
        %907 = vmatpush2.msra.mxu0 0.0
        %908 = vmatprep.subr.mxu0 0.0
        %909 = vmatpush2.msra.mxu0 0.0
        %910 = vmatprep.mubr.f32.mxu0 0.0
        %911 = vmatmul.mubr.f32.gmra.mxu0 %v821
        %v912 = vpop.f32.mrf.mxu0
        %v913 = vadd.f32 %v845, %v912
        %v914 = vpop.f32.mrf.mxu0
        %915 = vmatprep.mubr.f32.mxu0 0.0
        %916 = vmatmul.mubr.f32.gmra.mxu0 %v822
        %v917 = vpop.f32.mrf.mxu0
        %v918 = vadd.f32 %v845, %v917
        %v919 = vpop.f32.mrf.mxu0
        %920 = vmatprep.mubr.f32.mxu0 0.0
        %921 = vmatmul.mubr.f32.gmra.mxu0 %v823
        %v922 = vpop.f32.mrf.mxu0
        %v923 = vadd.f32 %v845, %v922
        %v924 = vpop.f32.mrf.mxu0
        %925 = vmatprep.mubr.f32.mxu0 0.0
        %926 = vmatmul.mubr.f32.gmra.mxu0 %v824
        %v927 = vpop.f32.mrf.mxu0
        %v928 = vadd.f32 %v845, %v927
        %v929 = vpop.f32.mrf.mxu0
        %930 = vdwg.mxu0
        %v931 = vadd.f32 %v913, %v474
        %v932 = vadd.f32 %v918, %v479
        %v933 = vadd.f32 %v923, %v484
        %v934 = vadd.f32 %v928, %v489
        %935 = vst [vmem:[%s160] sm:$0xff] %v931
        %936 = vst [vmem:[%s160 + $0x8] sm:$0xff] %v932
        %937 = vst [vmem:[%s160 + $0x10] sm:$0xff] %v933
        %938 = vst [vmem:[%s160 + $0x18] sm:$0xff] %v934
        %s939 = smul.u32 4, %s14
        %p940 = scmp.lt.s32.totalorder %s939, 7
        %s941 = scalar_select %p940, %s939, 7
        %s942 = smul.addr %s941, 8
        %s943 = scalar_lea.vmem %s2, %s942
        // Predicated region
        $region33: #{vae_forward.1} parent=27 // pred_check
          %p944 = pneg %p79
        $region34: #{vae_forward.1} parent=27 // pred_check_branch
          %946 = sbr.rel (%p944) target = $region36
        $region35: #{vae_forward.1} parent=27 // pred_region
          %s947 = smul.u32 4, %s14
        $region36: #{vae_forward.1} parent=27 // pred_fallthru
          _
      $region28: #{vae_forward.1} parent=5 // pred_fallthru
        _
      %p948 = scmp.le.s32.totalorder 2, %s9
      // Predicated region
      $region37: #{vae_forward.1} parent=5 // pred_check
        %p949 = pneg %p948
      $region38: #{vae_forward.1} parent=5 // pred_check_branch
        %951 = sbr.rel (%p949) target = $region40
      $region39: #{vae_forward.1} parent=5 // pred_region
        %s952 = ssub.s32 %s9, 2
        // Predicated region
        $region41: #{vae_forward.1} parent=39 // pred_check
          %p953 = pneg %p85
        $region42: #{vae_forward.1} parent=39 // pred_check_branch
          %955 = sbr.rel (%p953) target = $region44
        $region43: #{vae_forward.1} parent=39 // pred_region
          %s956 = smul.u32 4, %s15
          %p957 = scmp.lt.s32.totalorder %s956, 7
          %s958 = scalar_select %p957, %s956, 7
          %s959 = smul.addr %s958, 8
          %s960 = scalar_lea.vmem %s2, %s959
        $region44: #{vae_forward.1} parent=39 // pred_fallthru
          _
      $region40: #{vae_forward.1} parent=5 // pred_fallthru
        _
    $region6: #{vae_forward.1} parent=1 // loop_footer
      %s13 = sadd.s32 1, %s9
    $region7: #{vae_forward.1} parent=1 // loop_footer_branch
      %8 = sbr.rel target = $region3
    $region8: #{vae_forward.1} parent=1 // loop_exit
      _
    %961 = vsyncpa [#allocation3], 1
    %s962 = scalar_lea.sflag [#allocation3], 1
    %963 = vsyncpa %s962, 1

</llo_original>
